<compile_context>
chip_gen: v5e
topology: v5e:2x2
jax: 0.10.0
libtpu: 0.0.40
codegen_flags: <defaults>
</compile_context>

<pallas_src>
import jax
import jax.numpy as jnp
from jax.experimental import pallas as pl
from jax.experimental.pallas import tpu as pltpu

BN_EPS = 1e-5


# --------------------------------------------------------------------------
# Single fused kernel: conv(matmul, bias folded) + sigmoid + BatchNorm.
# --------------------------------------------------------------------------
def _conv_sigmoid_bn_kernel(w_ref, p_ref, gamma_ref, beta_ref, out_ref):
    # w_ref:     (Cout, K1)   weight matrix, last column = conv bias
    # p_ref:     (K1, M)      im2col patches (K-major), last row = ones
    # gamma_ref: (Cout, 1)    BN weight
    # beta_ref:  (Cout, 1)    BN bias
    # out_ref:   (Cout, M)    normalized output -- M is the lane axis
    v1 = jnp.dot(w_ref[...], p_ref[...], preferred_element_type=jnp.float32)  # MXU
    v2 = jax.nn.sigmoid(v1)                                                   # EUP
    mean = jnp.mean(v2, axis=1, keepdims=True)                                # (Cout, 1)
    centered = v2 - mean
    var = jnp.mean(centered * centered, axis=1, keepdims=True)                # two-pass var
    scale = gamma_ref[...] * jax.lax.rsqrt(var + BN_EPS)                      # (Cout, 1)
    out_ref[...] = centered * scale + beta_ref[...]                           # lane-dense store


def conv_sigmoid_bn(x_nchw, w_oihw, b, gamma, beta):
    """x_nchw: (N, 3, H, W) float32.  Returns (N, 24, Ho, Wo) float32."""
    N, Cin, H, W = x_nchw.shape
    Cout, _, KH, KW = w_oihw.shape
    stride, pad = 2, 1
    Ho = (H + 2 * pad - KH) // stride + 1
    Wo = (W + 2 * pad - KW) // stride + 1
    M = N * Ho * Wo
    K = Cin * KH * KW
    K1 = K + 1                      # extra ones-row folds the conv bias into the matmul

    # ---- glue (XLA, minimal): NCHW zero-pad + im2col, K-major (cin, kh, kw). ----
    x = x_nchw.astype(jnp.float32)
    x = jnp.pad(x, ((0, 0), (0, 0), (pad, pad), (pad, pad)))           # (N, Cin, Hp, Wp)
    taps = [x[:, :, kh:kh + stride * Ho:stride, kw:kw + stride * Wo:stride]
            for kh in range(KH) for kw in range(KW)]                   # (N,Cin,Ho,Wo) each
    patches = jnp.stack(taps, axis=0)                                  # (KH*KW, N, Cin, Ho, Wo)
    patches_t = jnp.transpose(patches, (2, 0, 1, 3, 4)).reshape(K, M)  # (K, M), rows (cin,kh,kw)
    patches_t = jnp.concatenate(
        [patches_t, jnp.ones((1, M), jnp.float32)], axis=0)            # (K1, M)

    # weight (Cout, Cin, KH, KW) -> (Cout, K) directly; append bias column.
    w_mat = w_oihw.reshape(Cout, K).astype(jnp.float32)
    w_mat = jnp.concatenate([w_mat, b.reshape(Cout, 1).astype(jnp.float32)], axis=1)

    gamma2 = gamma.reshape(Cout, 1).astype(jnp.float32)
    beta2 = beta.reshape(Cout, 1).astype(jnp.float32)

    # ---- single fused pallas_call: everything VMEM-resident, one launch ----
    vmem = pl.BlockSpec(memory_space=pltpu.MemorySpace.VMEM)
    out_t = pl.pallas_call(
        _conv_sigmoid_bn_kernel,
        out_shape=jax.ShapeDtypeStruct((Cout, M), jnp.float32),
        in_specs=[vmem, vmem, vmem, vmem],
        out_specs=vmem,
        cost_estimate=pl.CostEstimate(
            flops=2 * Cout * K1 * M + 6 * Cout * M,
            transcendentals=Cout * M + Cout,
            bytes_accessed=4 * (K1 * M + Cout * K1 + 2 * Cout + Cout * M)),
    )(w_mat, patches_t, gamma2, beta2)

    # ---- glue: (Cout, M) -> NCHW ----
    return out_t.reshape(Cout, N, Ho, Wo).transpose(1, 0, 2, 3)


def _reference(x_nchw, w_oihw, b, gamma, beta):
    """Pure-JAX reference (conv -> sigmoid -> batchnorm, training mode)."""
    v1 = jax.lax.conv_general_dilated(
        x_nchw, w_oihw, window_strides=(2, 2), padding=((1, 1), (1, 1)),
        dimension_numbers=("NCHW", "OIHW", "NCHW")) + b.reshape(1, -1, 1, 1)
    v2 = jax.nn.sigmoid(v1)
    mean = jnp.mean(v2, axis=(0, 2, 3), keepdims=True)
    var = jnp.mean((v2 - mean) ** 2, axis=(0, 2, 3), keepdims=True)
    return (v2 - mean) * jax.lax.rsqrt(var + BN_EPS) * gamma.reshape(1, -1, 1, 1) \
        + beta.reshape(1, -1, 1, 1)


if __name__ == "__main__":
    key = jax.random.PRNGKey(0)
    kx, kw, kb = jax.random.split(key, 3)

    # shapes from the module spec: x1 = torch.randn(1, 3, 64, 64)
    N, Cin, H, W = 1, 3, 64, 64
    Cout, KH, KW = 24, 3, 3

    x = jax.random.normal(kx, (N, Cin, H, W), dtype=jnp.float32)

    # deterministic parameter init (PyTorch-style uniform bounds)
    fan_in = Cin * KH * KW
    bound = 1.0 / (fan_in ** 0.5)
    w = jax.random.uniform(kw, (Cout, Cin, KH, KW), jnp.float32, -bound, bound)
    b = jax.random.uniform(kb, (Cout,), jnp.float32, -bound, bound)
    gamma = jnp.ones((Cout,), jnp.float32)   # BatchNorm2d default weight
    beta = jnp.zeros((Cout,), jnp.float32)   # BatchNorm2d default bias

    out = jax.block_until_ready(conv_sigmoid_bn(x, w, b, gamma, beta))
    ref = jax.block_until_ready(_reference(x, w, b, gamma, beta))

    assert out.shape == (N, Cout, H // 2, W // 2), out.shape
    max_err = float(jnp.max(jnp.abs(out - ref)))
    assert jnp.allclose(out, ref, atol=2e-4, rtol=2e-4), max_err
    print("KERNEL_OK")
</pallas_src>

<mosaic_0001>
module attributes {stable_mosaic.version = 11 : i64} {
  func.func @_conv_sigmoid_bn_kernel(%arg0: memref<24x28xf32, #tpu.memory_space<vmem>>, %arg1: memref<28x1024xf32, #tpu.memory_space<vmem>>, %arg2: memref<24x1xf32, #tpu.memory_space<vmem>>, %arg3: memref<24x1xf32, #tpu.memory_space<vmem>>, %arg4: memref<24x1024xf32, #tpu.memory_space<vmem>>) attributes {dimension_semantics = [], scalar_prefetch = 0 : i64, scratch_operands = 0 : i64, tpu.core_type = #tpu.core_type<tc>} {
    %c0 = arith.constant 0 : index
    %c0_0 = arith.constant 0 : index
    %0 = vector.load %arg0[%c0, %c0_0] : memref<24x28xf32, #tpu.memory_space<vmem>>, vector<24x28xf32>
    %c0_1 = arith.constant 0 : index
    %c0_2 = arith.constant 0 : index
    %1 = vector.load %arg1[%c0_1, %c0_2] : memref<28x1024xf32, #tpu.memory_space<vmem>>, vector<28x1024xf32>
    %cst = arith.constant dense<0.000000e+00> : vector<24x1024xf32>
    %2 = tpu.matmul %0, %1, %cst {dimension_numbers = #tpu.dot_dimension_numbers<[1], [0], [0], [1], [0, 0, 1, 1], [], []>} : vector<24x28xf32>, vector<28x1024xf32>, vector<24x1024xf32> -> vector<24x1024xf32>
    %3 = arith.negf %2 : vector<24x1024xf32>
    %4 = math.exp %3 : vector<24x1024xf32>
    %cst_3 = arith.constant 1.000000e+00 : f32
    %5 = vector.broadcast %cst_3 : f32 to vector<24x1024xf32>
    %6 = arith.addf %5, %4 : vector<24x1024xf32>
    %7 = arith.divf %5, %6 : vector<24x1024xf32>
    %cst_4 = arith.constant dense<0.000000e+00> : vector<24xf32>
    %8 = vector.multi_reduction <add>, %7, %cst_4 [1] : vector<24x1024xf32> to vector<24xf32>
    %9 = vector.shape_cast %8 : vector<24xf32> to vector<24x1xf32>
    %cst_5 = arith.constant 1.024000e+03 : f32
    %10 = vector.broadcast %cst_5 : f32 to vector<24x1xf32>
    %11 = arith.divf %9, %10 : vector<24x1xf32>
    %12 = vector.broadcast %11 : vector<24x1xf32> to vector<24x1024xf32>
    %13 = arith.subf %7, %12 : vector<24x1024xf32>
    %14 = arith.mulf %13, %13 : vector<24x1024xf32>
    %cst_6 = arith.constant dense<0.000000e+00> : vector<24xf32>
    %15 = vector.multi_reduction <add>, %14, %cst_6 [1] : vector<24x1024xf32> to vector<24xf32>
    %16 = vector.shape_cast %15 : vector<24xf32> to vector<24x1xf32>
    %cst_7 = arith.constant 1.024000e+03 : f32
    %17 = vector.broadcast %cst_7 : f32 to vector<24x1xf32>
    %18 = arith.divf %16, %17 : vector<24x1xf32>
    %c0_8 = arith.constant 0 : index
    %c0_9 = arith.constant 0 : index
    %19 = vector.load %arg2[%c0_8, %c0_9] : memref<24x1xf32, #tpu.memory_space<vmem>>, vector<24x1xf32>
    %cst_10 = arith.constant 9.99999974E-6 : f32
    %20 = vector.broadcast %cst_10 : f32 to vector<24x1xf32>
    %21 = arith.addf %18, %20 : vector<24x1xf32>
    %22 = math.rsqrt %21 : vector<24x1xf32>
    %23 = arith.mulf %19, %22 : vector<24x1xf32>
    %24 = vector.broadcast %23 : vector<24x1xf32> to vector<24x1024xf32>
    %25 = arith.mulf %13, %24 : vector<24x1024xf32>
    %c0_11 = arith.constant 0 : index
    %c0_12 = arith.constant 0 : index
    %26 = vector.load %arg3[%c0_11, %c0_12] : memref<24x1xf32, #tpu.memory_space<vmem>>, vector<24x1xf32>
    %27 = vector.broadcast %26 : vector<24x1xf32> to vector<24x1024xf32>
    %28 = arith.addf %25, %27 : vector<24x1024xf32>
    %c0_13 = arith.constant 0 : index
    %c0_14 = arith.constant 0 : index
    %29 = vector.load %arg4[%c0_13, %c0_14] : memref<24x1024xf32, #tpu.memory_space<vmem>>, vector<24x1024xf32>
    tpu.vector_store %arg4[%c0_13, %c0_14], %28 {strides = array<i32>} : memref<24x1024xf32, #tpu.memory_space<vmem>>, vector<24x1024xf32>,
    return
  }
}

</mosaic_0001>

<llo_original>
// kernel: tpu_custom_call.1
$region0: #{tpu_custom_call.1}
  #allocation0 [shape = 'u32[]', space=smem, size = 0x4, offset = 0x4, fixed_abs, tag = 'smem constant byte address 0x4 - core index']
  #allocation1 [shape = 'u32[72,128]{1,0:T(1,128)}', space=vmem, size = 0x9000, scoped, tag = 'internal scratch']
  %s0 = inlined_call_operand.vmem [shape: f32[24,28], index: 0, kind: input, shape index: {}]
  %s1 = inlined_call_operand.hbm [shape: f32[28,1024], index: 1, kind: input, shape index: {}]
  %s2 = inlined_call_operand.vmem [shape: f32[24,1], index: 2, kind: input, shape index: {}]
  %s3 = inlined_call_operand.vmem [shape: f32[24,1], index: 3, kind: input, shape index: {}]
  %s4 = inlined_call_operand.hbm [shape: f32[24,1024], index: 4, kind: output, shape index: {}]
  %s5 = sld [smem:[#allocation0]]
  $region30: #{tpu_custom_call.1} parent=0
    _
  %s7 = ssub.s32 1, %s5
  %s8 = scalar_select 0, %s7, %s5
  $region1: #{tpu_custom_call.1} parent=0
    #allocation2 [shape = 'u8[131072]{0}', space=vmem, size = 0x20000, scoped, tag = 'input window, operand 1, single buffered']
    #allocation3 [shape = 's32[1]{0}', space=sflag, size = 0x4, scoped, tag = 'scoped memory for tpu_custom_call.1']
    #allocation4 [shape = 's32[1]{0}', space=sflag, size = 0x4, scoped, tag = 'scoped memory for tpu_custom_call.1']
    #allocation5 [shape = 'u8[98304]{0}', space=vmem, size = 0x18000, scoped, tag = 'output window, operand 0, single buffered']
    %9 = vsyncpa [#allocation3], 0
    %10 = vsyncpa [#allocation4], 0
    // Predicated region
    $region2: #{tpu_custom_call.1} parent=1 // pred_check
      _
    $region3: #{tpu_custom_call.1} parent=1 // pred_check_branch
      %12 = sbr.rel (0) target = $region5
    $region4: #{tpu_custom_call.1} parent=1 // pred_region
      _
    $region5: #{tpu_custom_call.1} parent=1 // pred_fallthru
      _
    // Predicated region
    $region6: #{tpu_custom_call.1} parent=1 // pred_check
      _
    $region7: #{tpu_custom_call.1} parent=1 // pred_check_branch
      %14 = sbr.rel (0) target = $region9
    $region8: #{tpu_custom_call.1} parent=1 // pred_region
      %16 = vsyncadd [#allocation3], 0
      %s17 = sshll.u32 %s1, 4
      %s18 = int_to_ptr.hbm [resolvable:$true] %s17
      %s19 = sshll.u32 [#allocation2], 4
      %s20 = int_to_ptr.vmem [resolvable:$true] %s19
      %25 = dma.hbm_to_vmem [thread:$0]  %s18, 4096, %s20, [#allocation3], 1024, 1024, 64
    $region9: #{tpu_custom_call.1} parent=1 // pred_fallthru
      _
    // Predicated region
    $region10: #{tpu_custom_call.1} parent=1 // pred_check
      _
    $region11: #{tpu_custom_call.1} parent=1 // pred_check_branch
      %27 = sbr.rel (0) target = $region13
    $region12: #{tpu_custom_call.1} parent=1 // pred_region
      _
    $region13: #{tpu_custom_call.1} parent=1 // pred_fallthru
      _
    // Predicated region
    $region14: #{tpu_custom_call.1} parent=1 // pred_check
      _
    $region15: #{tpu_custom_call.1} parent=1 // pred_check_branch
      %29 = sbr.rel (0) target = $region17
    $region16: #{tpu_custom_call.1} parent=1 // pred_region
      _
    $region17: #{tpu_custom_call.1} parent=1 // pred_fallthru
      _
    // Predicated region
    $region18: #{tpu_custom_call.1} parent=1 // pred_check
      _
    $region19: #{tpu_custom_call.1} parent=1 // pred_check_branch
      %31 = sbr.rel (0) target = $region21
    $region20: #{tpu_custom_call.1} parent=1 // pred_region
      %33 = dma.done [#allocation3], 4096
    $region21: #{tpu_custom_call.1} parent=1 // pred_fallthru
      _
    %v34 = vld [vmem:[%s0] sm:$0xff]
    %v35 = vld [vmem:[%s0 + $0x8] sm:$0xff]
    %v36 = vld [vmem:[%s0 + $0x10] sm:$0xff]
    %v37 = vld [vmem:[#allocation2] sm:$0xff]
    %v38 = vld [vmem:[#allocation2 + $0x8] sm:$0xff]
    %v39 = vld [vmem:[#allocation2 + $0x10] sm:$0xff]
    %v40 = vld [vmem:[#allocation2 + $0x18] sm:$0xff]
    %v41 = vld [vmem:[#allocation2 + $0x20] sm:$0xff]
    %v42 = vld [vmem:[#allocation2 + $0x28] sm:$0xff]
    %v43 = vld [vmem:[#allocation2 + $0x30] sm:$0xff]
    %v44 = vld [vmem:[#allocation2 + $0x38] sm:$0xff]
    %v45 = vld [vmem:[#allocation2 + $0x40] sm:$0xff]
    %v46 = vld [vmem:[#allocation2 + $0x48] sm:$0xff]
    %v47 = vld [vmem:[#allocation2 + $0x50] sm:$0xff]
    %v48 = vld [vmem:[#allocation2 + $0x58] sm:$0xff]
    %v49 = vld [vmem:[#allocation2 + $0x60] sm:$0xff]
    %v50 = vld [vmem:[#allocation2 + $0x68] sm:$0xff]
    %v51 = vld [vmem:[#allocation2 + $0x70] sm:$0xff]
    %v52 = vld [vmem:[#allocation2 + $0x78] sm:$0xff]
    %v53 = vld [vmem:[#allocation2 + $0x80] sm:$0xff]
    %v54 = vld [vmem:[#allocation2 + $0x88] sm:$0xff]
    %v55 = vld [vmem:[#allocation2 + $0x90] sm:$0xff]
    %v56 = vld [vmem:[#allocation2 + $0x98] sm:$0xff]
    %v57 = vld [vmem:[#allocation2 + $0xa0] sm:$0xff]
    %v58 = vld [vmem:[#allocation2 + $0xa8] sm:$0xff]
    %v59 = vld [vmem:[#allocation2 + $0xb0] sm:$0xff]
    %v60 = vld [vmem:[#allocation2 + $0xb8] sm:$0xff]
    %v61 = vld [vmem:[#allocation2 + $0xc0] sm:$0xf]
    %v62 = vld [vmem:[#allocation2 + $0xc8] sm:$0xf]
    %v63 = vld [vmem:[#allocation2 + $0xd0] sm:$0xf]
    %v64 = vld [vmem:[#allocation2 + $0xd8] sm:$0xf]
    %v65 = vld [vmem:[#allocation2 + $0xe0] sm:$0xf]
    %v66 = vld [vmem:[#allocation2 + $0xe8] sm:$0xf]
    %v67 = vld [vmem:[#allocation2 + $0xf0] sm:$0xf]
    %v68 = vld [vmem:[#allocation2 + $0xf8] sm:$0xf]
    %vm69 = vcmask 228352
    %v71 = vsel %vm69, %v34, 0
    %v74 = vsel %vm69, %v35, 0
    %v77 = vsel %vm69, %v36, 0
    %vm79 = vcmask 1043456
    %v81 = vsel %vm79, %v61, 0
    %v84 = vsel %vm79, %v62, 0
    %v87 = vsel %vm79, %v63, 0
    %v90 = vsel %vm79, %v64, 0
    %v93 = vsel %vm79, %v65, 0
    %v96 = vsel %vm79, %v66, 0
    %v99 = vsel %vm79, %v67, 0
    %v102 = vsel %vm79, %v68, 0
    %104 = vmatpush.msra.mxu0 0.0
    %105 = vmatpush.msra.mxu0 0.0
    %106 = vmatpush.msra.mxu0 0.0
    %107 = vmatpush.msra.mxu0 0.0
    %108 = vmatpush.msra.mxu0 0.0
    %109 = vmatpush.msra.mxu0 0.0
    %110 = vmatpush.msra.mxu0 0.0
    %111 = vmatpush.msra.mxu0 0.0
    %112 = vmatpush.msra.mxu0 0.0
    %113 = vmatpush.msra.mxu0 0.0
    %114 = vmatpush.msra.mxu0 0.0
    %115 = vmatpush.msra.mxu0 0.0
    %116 = vmatpush.msra.mxu0 %v81
    %117 = vmatpush.msra.mxu0 %v53
    %118 = vmatpush.msra.mxu0 %v45
    %119 = vmatpush.msra.mxu0 %v37
    %120 = vmatmul.f32.gmra.mxu0 %v71
    %v121 = vpop.f32.mrf.mxu0
    %v122 = vadd.f32 0.0, %v121
    %123 = vmatmul.f32.gmra.mxu0 %v74
    %v124 = vpop.f32.mrf.mxu0
    %v125 = vadd.f32 0.0, %v124
    %126 = vmatmul.f32.gmra.mxu0 %v77
    %v127 = vpop.f32.mrf.mxu0
    %v128 = vadd.f32 0.0, %v127
    %129 = vdwg.mxu0
    %130 = vmatpush.msra.mxu0 0.0
    %131 = vmatpush.msra.mxu0 0.0
    %132 = vmatpush.msra.mxu0 0.0
    %133 = vmatpush.msra.mxu0 0.0
    %134 = vmatpush.msra.mxu0 0.0
    %135 = vmatpush.msra.mxu0 0.0
    %136 = vmatpush.msra.mxu0 0.0
    %137 = vmatpush.msra.mxu0 0.0
    %138 = vmatpush.msra.mxu0 0.0
    %139 = vmatpush.msra.mxu0 0.0
    %140 = vmatpush.msra.mxu0 0.0
    %141 = vmatpush.msra.mxu0 0.0
    %142 = vmatpush.msra.mxu0 %v84
    %143 = vmatpush.msra.mxu0 %v54
    %144 = vmatpush.msra.mxu0 %v46
    %145 = vmatpush.msra.mxu0 %v38
    %146 = vmatmul.f32.gmra.mxu0 %v71
    %v147 = vpop.f32.mrf.mxu0
    %v148 = vadd.f32 0.0, %v147
    %149 = vmatmul.f32.gmra.mxu0 %v74
    %v150 = vpop.f32.mrf.mxu0
    %v151 = vadd.f32 0.0, %v150
    %152 = vmatmul.f32.gmra.mxu0 %v77
    %v153 = vpop.f32.mrf.mxu0
    %v154 = vadd.f32 0.0, %v153
    %155 = vdwg.mxu0
    %156 = vmatpush.msra.mxu0 0.0
    %157 = vmatpush.msra.mxu0 0.0
    %158 = vmatpush.msra.mxu0 0.0
    %159 = vmatpush.msra.mxu0 0.0
    %160 = vmatpush.msra.mxu0 0.0
    %161 = vmatpush.msra.mxu0 0.0
    %162 = vmatpush.msra.mxu0 0.0
    %163 = vmatpush.msra.mxu0 0.0
    %164 = vmatpush.msra.mxu0 0.0
    %165 = vmatpush.msra.mxu0 0.0
    %166 = vmatpush.msra.mxu0 0.0
    %167 = vmatpush.msra.mxu0 0.0
    %168 = vmatpush.msra.mxu0 %v87
    %169 = vmatpush.msra.mxu0 %v55
    %170 = vmatpush.msra.mxu0 %v47
    %171 = vmatpush.msra.mxu0 %v39
    %172 = vmatmul.f32.gmra.mxu0 %v71
    %v173 = vpop.f32.mrf.mxu0
    %v174 = vadd.f32 0.0, %v173
    %175 = vmatmul.f32.gmra.mxu0 %v74
    %v176 = vpop.f32.mrf.mxu0
    %v177 = vadd.f32 0.0, %v176
    %178 = vmatmul.f32.gmra.mxu0 %v77
    %v179 = vpop.f32.mrf.mxu0
    %v180 = vadd.f32 0.0, %v179
    %181 = vdwg.mxu0
    %182 = vmatpush.msra.mxu0 0.0
    %183 = vmatpush.msra.mxu0 0.0
    %184 = vmatpush.msra.mxu0 0.0
    %185 = vmatpush.msra.mxu0 0.0
    %186 = vmatpush.msra.mxu0 0.0
    %187 = vmatpush.msra.mxu0 0.0
    %188 = vmatpush.msra.mxu0 0.0
    %189 = vmatpush.msra.mxu0 0.0
    %190 = vmatpush.msra.mxu0 0.0
    %191 = vmatpush.msra.mxu0 0.0
    %192 = vmatpush.msra.mxu0 0.0
    %193 = vmatpush.msra.mxu0 0.0
    %194 = vmatpush.msra.mxu0 %v90
    %195 = vmatpush.msra.mxu0 %v56
    %196 = vmatpush.msra.mxu0 %v48
    %197 = vmatpush.msra.mxu0 %v40
    %198 = vmatmul.f32.gmra.mxu0 %v71
    %v199 = vpop.f32.mrf.mxu0
    %v200 = vadd.f32 0.0, %v199
    %201 = vmatmul.f32.gmra.mxu0 %v74
    %v202 = vpop.f32.mrf.mxu0
    %v203 = vadd.f32 0.0, %v202
    %204 = vmatmul.f32.gmra.mxu0 %v77
    %v205 = vpop.f32.mrf.mxu0
    %v206 = vadd.f32 0.0, %v205
    %207 = vdwg.mxu0
    %208 = vmatpush.msra.mxu0 0.0
    %209 = vmatpush.msra.mxu0 0.0
    %210 = vmatpush.msra.mxu0 0.0
    %211 = vmatpush.msra.mxu0 0.0
    %212 = vmatpush.msra.mxu0 0.0
    %213 = vmatpush.msra.mxu0 0.0
    %214 = vmatpush.msra.mxu0 0.0
    %215 = vmatpush.msra.mxu0 0.0
    %216 = vmatpush.msra.mxu0 0.0
    %217 = vmatpush.msra.mxu0 0.0
    %218 = vmatpush.msra.mxu0 0.0
    %219 = vmatpush.msra.mxu0 0.0
    %220 = vmatpush.msra.mxu0 %v93
    %221 = vmatpush.msra.mxu0 %v57
    %222 = vmatpush.msra.mxu0 %v49
    %223 = vmatpush.msra.mxu0 %v41
    %224 = vmatmul.f32.gmra.mxu0 %v71
    %v225 = vpop.f32.mrf.mxu0
    %v226 = vadd.f32 0.0, %v225
    %227 = vmatmul.f32.gmra.mxu0 %v74
    %v228 = vpop.f32.mrf.mxu0
    %v229 = vadd.f32 0.0, %v228
    %230 = vmatmul.f32.gmra.mxu0 %v77
    %v231 = vpop.f32.mrf.mxu0
    %v232 = vadd.f32 0.0, %v231
    %233 = vdwg.mxu0
    %234 = vmatpush.msra.mxu0 0.0
    %235 = vmatpush.msra.mxu0 0.0
    %236 = vmatpush.msra.mxu0 0.0
    %237 = vmatpush.msra.mxu0 0.0
    %238 = vmatpush.msra.mxu0 0.0
    %239 = vmatpush.msra.mxu0 0.0
    %240 = vmatpush.msra.mxu0 0.0
    %241 = vmatpush.msra.mxu0 0.0
    %242 = vmatpush.msra.mxu0 0.0
    %243 = vmatpush.msra.mxu0 0.0
    %244 = vmatpush.msra.mxu0 0.0
    %245 = vmatpush.msra.mxu0 0.0
    %246 = vmatpush.msra.mxu0 %v96
    %247 = vmatpush.msra.mxu0 %v58
    %248 = vmatpush.msra.mxu0 %v50
    %249 = vmatpush.msra.mxu0 %v42
    %250 = vmatmul.f32.gmra.mxu0 %v71
    %v251 = vpop.f32.mrf.mxu0
    %v252 = vadd.f32 0.0, %v251
    %253 = vmatmul.f32.gmra.mxu0 %v74
    %v254 = vpop.f32.mrf.mxu0
    %v255 = vadd.f32 0.0, %v254
    %256 = vmatmul.f32.gmra.mxu0 %v77
    %v257 = vpop.f32.mrf.mxu0
    %v258 = vadd.f32 0.0, %v257
    %259 = vdwg.mxu0
    %260 = vmatpush.msra.mxu0 0.0
    %261 = vmatpush.msra.mxu0 0.0
    %262 = vmatpush.msra.mxu0 0.0
    %263 = vmatpush.msra.mxu0 0.0
    %264 = vmatpush.msra.mxu0 0.0
    %265 = vmatpush.msra.mxu0 0.0
    %266 = vmatpush.msra.mxu0 0.0
    %267 = vmatpush.msra.mxu0 0.0
    %268 = vmatpush.msra.mxu0 0.0
    %269 = vmatpush.msra.mxu0 0.0
    %270 = vmatpush.msra.mxu0 0.0
    %271 = vmatpush.msra.mxu0 0.0
    %272 = vmatpush.msra.mxu0 %v99
    %273 = vmatpush.msra.mxu0 %v59
    %274 = vmatpush.msra.mxu0 %v51
    %275 = vmatpush.msra.mxu0 %v43
    %276 = vmatmul.f32.gmra.mxu0 %v71
    %v277 = vpop.f32.mrf.mxu0
    %v278 = vadd.f32 0.0, %v277
    %279 = vmatmul.f32.gmra.mxu0 %v74
    %v280 = vpop.f32.mrf.mxu0
    %v281 = vadd.f32 0.0, %v280
    %282 = vmatmul.f32.gmra.mxu0 %v77
    %v283 = vpop.f32.mrf.mxu0
    %v284 = vadd.f32 0.0, %v283
    %285 = vdwg.mxu0
    %286 = vmatpush.msra.mxu0 0.0
    %287 = vmatpush.msra.mxu0 0.0
    %288 = vmatpush.msra.mxu0 0.0
    %289 = vmatpush.msra.mxu0 0.0
    %290 = vmatpush.msra.mxu0 0.0
    %291 = vmatpush.msra.mxu0 0.0
    %292 = vmatpush.msra.mxu0 0.0
    %293 = vmatpush.msra.mxu0 0.0
    %294 = vmatpush.msra.mxu0 0.0
    %295 = vmatpush.msra.mxu0 0.0
    %296 = vmatpush.msra.mxu0 0.0
    %297 = vmatpush.msra.mxu0 0.0
    %298 = vmatpush.msra.mxu0 %v102
    %299 = vmatpush.msra.mxu0 %v60
    %300 = vmatpush.msra.mxu0 %v52
    %301 = vmatpush.msra.mxu0 %v44
    %302 = vmatmul.f32.gmra.mxu0 %v71
    %v303 = vpop.f32.mrf.mxu0
    %v304 = vadd.f32 0.0, %v303
    %305 = vmatmul.f32.gmra.mxu0 %v74
    %v306 = vpop.f32.mrf.mxu0
    %v307 = vadd.f32 0.0, %v306
    %308 = vmatmul.f32.gmra.mxu0 %v77
    %v309 = vpop.f32.mrf.mxu0
    %v310 = vadd.f32 0.0, %v309
    %311 = vdwg.mxu0
    %v312 = vxor.u32 %v122, 2147483648
    %v313 = vxor.u32 %v148, 2147483648
    %v314 = vxor.u32 %v174, 2147483648
    %v315 = vxor.u32 %v200, 2147483648
    %v316 = vxor.u32 %v226, 2147483648
    %v317 = vxor.u32 %v252, 2147483648
    %v318 = vxor.u32 %v278, 2147483648
    %v319 = vxor.u32 %v304, 2147483648
    %v320 = vxor.u32 %v125, 2147483648
    %v321 = vxor.u32 %v151, 2147483648
    %v322 = vxor.u32 %v177, 2147483648
    %v323 = vxor.u32 %v203, 2147483648
    %v324 = vxor.u32 %v229, 2147483648
    %v325 = vxor.u32 %v255, 2147483648
    %v326 = vxor.u32 %v281, 2147483648
    %v327 = vxor.u32 %v307, 2147483648
    %v328 = vxor.u32 %v128, 2147483648
    %v329 = vxor.u32 %v154, 2147483648
    %v330 = vxor.u32 %v180, 2147483648
    %v331 = vxor.u32 %v206, 2147483648
    %v332 = vxor.u32 %v232, 2147483648
    %v333 = vxor.u32 %v258, 2147483648
    %v334 = vxor.u32 %v284, 2147483648
    %v335 = vxor.u32 %v310, 2147483648
    %v336 = vmul.f32 %v312, 1.442695
    %v337 = vpow.pop %v336
    %v338 = vmul.f32 %v313, 1.442695
    %v339 = vpow.pop %v338
    %v340 = vmul.f32 %v314, 1.442695
    %v341 = vpow.pop %v340
    %v342 = vmul.f32 %v315, 1.442695
    %v343 = vpow.pop %v342
    %v344 = vmul.f32 %v316, 1.442695
    %v345 = vpow.pop %v344
    %v346 = vmul.f32 %v317, 1.442695
    %v347 = vpow.pop %v346
    %v348 = vmul.f32 %v318, 1.442695
    %v349 = vpow.pop %v348
    %v350 = vmul.f32 %v319, 1.442695
    %v351 = vpow.pop %v350
    %v352 = vmul.f32 %v320, 1.442695
    %v353 = vpow.pop %v352
    %v354 = vmul.f32 %v321, 1.442695
    %v355 = vpow.pop %v354
    %v356 = vmul.f32 %v322, 1.442695
    %v357 = vpow.pop %v356
    %v358 = vmul.f32 %v323, 1.442695
    %v359 = vpow.pop %v358
    %v360 = vmul.f32 %v324, 1.442695
    %v361 = vpow.pop %v360
    %v362 = vmul.f32 %v325, 1.442695
    %v363 = vpow.pop %v362
    %v364 = vmul.f32 %v326, 1.442695
    %v365 = vpow.pop %v364
    %v366 = vmul.f32 %v327, 1.442695
    %v367 = vpow.pop %v366
    %v368 = vmul.f32 %v328, 1.442695
    %v369 = vpow.pop %v368
    %v370 = vmul.f32 %v329, 1.442695
    %v371 = vpow.pop %v370
    %v372 = vmul.f32 %v330, 1.442695
    %v373 = vpow.pop %v372
    %v374 = vmul.f32 %v331, 1.442695
    %v375 = vpow.pop %v374
    %v376 = vmul.f32 %v332, 1.442695
    %v377 = vpow.pop %v376
    %v378 = vmul.f32 %v333, 1.442695
    %v379 = vpow.pop %v378
    %v380 = vmul.f32 %v334, 1.442695
    %v381 = vpow.pop %v380
    %v382 = vmul.f32 %v335, 1.442695
    %v383 = vpow.pop %v382
    %v384 = vadd.f32 %v337, 1.0
    %v385 = vadd.f32 %v339, 1.0
    %v386 = vadd.f32 %v341, 1.0
    %v387 = vadd.f32 %v343, 1.0
    %v388 = vadd.f32 %v345, 1.0
    %v389 = vadd.f32 %v347, 1.0
    %v390 = vadd.f32 %v349, 1.0
    %v391 = vadd.f32 %v351, 1.0
    %v392 = vadd.f32 %v353, 1.0
    %v393 = vadd.f32 %v355, 1.0
    %v394 = vadd.f32 %v357, 1.0
    %v395 = vadd.f32 %v359, 1.0
    %v396 = vadd.f32 %v361, 1.0
    %v397 = vadd.f32 %v363, 1.0
    %v398 = vadd.f32 %v365, 1.0
    %v399 = vadd.f32 %v367, 1.0
    %v400 = vadd.f32 %v369, 1.0
    %v401 = vadd.f32 %v371, 1.0
    %v402 = vadd.f32 %v373, 1.0
    %v403 = vadd.f32 %v375, 1.0
    %v404 = vadd.f32 %v377, 1.0
    %v405 = vadd.f32 %v379, 1.0
    %v406 = vadd.f32 %v381, 1.0
    %v407 = vadd.f32 %v383, 1.0
    %v408 = vrcp.pop %v384
    %v409 = vmul.f32 %v384, %v408
    %v410 = vsub.f32 1.0, %v409
    %v411 = vmul.f32 %v408, %v410
    %v412 = vadd.f32 %v408, %v411
    %vm413 = vweird.f32 %v384
    %vm414 = vweird.f32 %v408
    %vm415 = vmor %vm413, %vm414
    %v416 = vsel %vm415, %v408, %v412
    %v417 = vand.u32 2147483647, %v384
    %vm418 = vcmp.eq.f32.partialorder %v417, 8.507059e+37
    %v419 = vand.u32 %v384, 2147483648
    %v420 = vor.u32 1.1754944e-38, %v419
    %v421 = vsel %vm418, %v420, %v416
    %v422 = vmul.f32 1.0, %v421
    %v423 = vrcp.pop %v385
    %v424 = vmul.f32 %v385, %v423
    %v425 = vsub.f32 1.0, %v424
    %v426 = vmul.f32 %v423, %v425
    %v427 = vadd.f32 %v423, %v426
    %vm428 = vweird.f32 %v385
    %vm429 = vweird.f32 %v423
    %vm430 = vmor %vm428, %vm429
    %v431 = vsel %vm430, %v423, %v427
    %v432 = vand.u32 2147483647, %v385
    %vm433 = vcmp.eq.f32.partialorder %v432, 8.507059e+37
    %v434 = vand.u32 %v385, 2147483648
    %v435 = vor.u32 1.1754944e-38, %v434
    %v436 = vsel %vm433, %v435, %v431
    %v437 = vmul.f32 1.0, %v436
    %v438 = vrcp.pop %v386
    %v439 = vmul.f32 %v386, %v438
    %v440 = vsub.f32 1.0, %v439
    %v441 = vmul.f32 %v438, %v440
    %v442 = vadd.f32 %v438, %v441
    %vm443 = vweird.f32 %v386
    %vm444 = vweird.f32 %v438
    %vm445 = vmor %vm443, %vm444
    %v446 = vsel %vm445, %v438, %v442
    %v447 = vand.u32 2147483647, %v386
    %vm448 = vcmp.eq.f32.partialorder %v447, 8.507059e+37
    %v449 = vand.u32 %v386, 2147483648
    %v450 = vor.u32 1.1754944e-38, %v449
    %v451 = vsel %vm448, %v450, %v446
    %v452 = vmul.f32 1.0, %v451
    %v453 = vrcp.pop %v387
    %v454 = vmul.f32 %v387, %v453
    %v455 = vsub.f32 1.0, %v454
    %v456 = vmul.f32 %v453, %v455
    %v457 = vadd.f32 %v453, %v456
    %vm458 = vweird.f32 %v387
    %vm459 = vweird.f32 %v453
    %vm460 = vmor %vm458, %vm459
    %v461 = vsel %vm460, %v453, %v457
    %v462 = vand.u32 2147483647, %v387
    %vm463 = vcmp.eq.f32.partialorder %v462, 8.507059e+37
    %v464 = vand.u32 %v387, 2147483648
    %v465 = vor.u32 1.1754944e-38, %v464
    %v466 = vsel %vm463, %v465, %v461
    %v467 = vmul.f32 1.0, %v466
    %v468 = vrcp.pop %v388
    %v469 = vmul.f32 %v388, %v468
    %v470 = vsub.f32 1.0, %v469
    %v471 = vmul.f32 %v468, %v470
    %v472 = vadd.f32 %v468, %v471
    %vm473 = vweird.f32 %v388
    %vm474 = vweird.f32 %v468
    %vm475 = vmor %vm473, %vm474
    %v476 = vsel %vm475, %v468, %v472
    %v477 = vand.u32 2147483647, %v388
    %vm478 = vcmp.eq.f32.partialorder %v477, 8.507059e+37
    %v479 = vand.u32 %v388, 2147483648
    %v480 = vor.u32 1.1754944e-38, %v479
    %v481 = vsel %vm478, %v480, %v476
    %v482 = vmul.f32 1.0, %v481
    %v483 = vrcp.pop %v389
    %v484 = vmul.f32 %v389, %v483
    %v485 = vsub.f32 1.0, %v484
    %v486 = vmul.f32 %v483, %v485
    %v487 = vadd.f32 %v483, %v486
    %vm488 = vweird.f32 %v389
    %vm489 = vweird.f32 %v483
    %vm490 = vmor %vm488, %vm489
    %v491 = vsel %vm490, %v483, %v487
    %v492 = vand.u32 2147483647, %v389
    %vm493 = vcmp.eq.f32.partialorder %v492, 8.507059e+37
    %v494 = vand.u32 %v389, 2147483648
    %v495 = vor.u32 1.1754944e-38, %v494
    %v496 = vsel %vm493, %v495, %v491
    %v497 = vmul.f32 1.0, %v496
    %v498 = vrcp.pop %v390
    %v499 = vmul.f32 %v390, %v498
    %v500 = vsub.f32 1.0, %v499
    %v501 = vmul.f32 %v498, %v500
    %v502 = vadd.f32 %v498, %v501
    %vm503 = vweird.f32 %v390
    %vm504 = vweird.f32 %v498
    %vm505 = vmor %vm503, %vm504
    %v506 = vsel %vm505, %v498, %v502
    %v507 = vand.u32 2147483647, %v390
    %vm508 = vcmp.eq.f32.partialorder %v507, 8.507059e+37
    %v509 = vand.u32 %v390, 2147483648
    %v510 = vor.u32 1.1754944e-38, %v509
    %v511 = vsel %vm508, %v510, %v506
    %v512 = vmul.f32 1.0, %v511
    %v513 = vrcp.pop %v391
    %v514 = vmul.f32 %v391, %v513
    %v515 = vsub.f32 1.0, %v514
    %v516 = vmul.f32 %v513, %v515
    %v517 = vadd.f32 %v513, %v516
    %vm518 = vweird.f32 %v391
    %vm519 = vweird.f32 %v513
    %vm520 = vmor %vm518, %vm519
    %v521 = vsel %vm520, %v513, %v517
    %v522 = vand.u32 2147483647, %v391
    %vm523 = vcmp.eq.f32.partialorder %v522, 8.507059e+37
    %v524 = vand.u32 %v391, 2147483648
    %v525 = vor.u32 1.1754944e-38, %v524
    %v526 = vsel %vm523, %v525, %v521
    %v527 = vmul.f32 1.0, %v526
    %v528 = vrcp.pop %v392
    %v529 = vmul.f32 %v392, %v528
    %v530 = vsub.f32 1.0, %v529
    %v531 = vmul.f32 %v528, %v530
    %v532 = vadd.f32 %v528, %v531
    %vm533 = vweird.f32 %v392
    %vm534 = vweird.f32 %v528
    %vm535 = vmor %vm533, %vm534
    %v536 = vsel %vm535, %v528, %v532
    %v537 = vand.u32 2147483647, %v392
    %vm538 = vcmp.eq.f32.partialorder %v537, 8.507059e+37
    %v539 = vand.u32 %v392, 2147483648
    %v540 = vor.u32 1.1754944e-38, %v539
    %v541 = vsel %vm538, %v540, %v536
    %v542 = vmul.f32 1.0, %v541
    %v543 = vrcp.pop %v393
    %v544 = vmul.f32 %v393, %v543
    %v545 = vsub.f32 1.0, %v544
    %v546 = vmul.f32 %v543, %v545
    %v547 = vadd.f32 %v543, %v546
    %vm548 = vweird.f32 %v393
    %vm549 = vweird.f32 %v543
    %vm550 = vmor %vm548, %vm549
    %v551 = vsel %vm550, %v543, %v547
    %v552 = vand.u32 2147483647, %v393
    %vm553 = vcmp.eq.f32.partialorder %v552, 8.507059e+37
    %v554 = vand.u32 %v393, 2147483648
    %v555 = vor.u32 1.1754944e-38, %v554
    %v556 = vsel %vm553, %v555, %v551
    %v557 = vmul.f32 1.0, %v556
    %v558 = vrcp.pop %v394
    %v559 = vmul.f32 %v394, %v558
    %v560 = vsub.f32 1.0, %v559
    %v561 = vmul.f32 %v558, %v560
    %v562 = vadd.f32 %v558, %v561
    %vm563 = vweird.f32 %v394
    %vm564 = vweird.f32 %v558
    %vm565 = vmor %vm563, %vm564
    %v566 = vsel %vm565, %v558, %v562
    %v567 = vand.u32 2147483647, %v394
    %vm568 = vcmp.eq.f32.partialorder %v567, 8.507059e+37
    %v569 = vand.u32 %v394, 2147483648
    %v570 = vor.u32 1.1754944e-38, %v569
    %v571 = vsel %vm568, %v570, %v566
    %v572 = vmul.f32 1.0, %v571
    %v573 = vrcp.pop %v395
    %v574 = vmul.f32 %v395, %v573
    %v575 = vsub.f32 1.0, %v574
    %v576 = vmul.f32 %v573, %v575
    %v577 = vadd.f32 %v573, %v576
    %vm578 = vweird.f32 %v395
    %vm579 = vweird.f32 %v573
    %vm580 = vmor %vm578, %vm579
    %v581 = vsel %vm580, %v573, %v577
    %v582 = vand.u32 2147483647, %v395
    %vm583 = vcmp.eq.f32.partialorder %v582, 8.507059e+37
    %v584 = vand.u32 %v395, 2147483648
    %v585 = vor.u32 1.1754944e-38, %v584
    %v586 = vsel %vm583, %v585, %v581
    %v587 = vmul.f32 1.0, %v586
    %v588 = vrcp.pop %v396
    %v589 = vmul.f32 %v396, %v588
    %v590 = vsub.f32 1.0, %v589
    %v591 = vmul.f32 %v588, %v590
    %v592 = vadd.f32 %v588, %v591
    %vm593 = vweird.f32 %v396
    %vm594 = vweird.f32 %v588
    %vm595 = vmor %vm593, %vm594
    %v596 = vsel %vm595, %v588, %v592
    %v597 = vand.u32 2147483647, %v396
    %vm598 = vcmp.eq.f32.partialorder %v597, 8.507059e+37
    %v599 = vand.u32 %v396, 2147483648
    %v600 = vor.u32 1.1754944e-38, %v599
    %v601 = vsel %vm598, %v600, %v596
    %v602 = vmul.f32 1.0, %v601
    %v603 = vrcp.pop %v397
    %v604 = vmul.f32 %v397, %v603
    %v605 = vsub.f32 1.0, %v604
    %v606 = vmul.f32 %v603, %v605
    %v607 = vadd.f32 %v603, %v606
    %vm608 = vweird.f32 %v397
    %vm609 = vweird.f32 %v603
    %vm610 = vmor %vm608, %vm609
    %v611 = vsel %vm610, %v603, %v607
    %v612 = vand.u32 2147483647, %v397
    %vm613 = vcmp.eq.f32.partialorder %v612, 8.507059e+37
    %v614 = vand.u32 %v397, 2147483648
    %v615 = vor.u32 1.1754944e-38, %v614
    %v616 = vsel %vm613, %v615, %v611
    %v617 = vmul.f32 1.0, %v616
    %v618 = vrcp.pop %v398
    %v619 = vmul.f32 %v398, %v618
    %v620 = vsub.f32 1.0, %v619
    %v621 = vmul.f32 %v618, %v620
    %v622 = vadd.f32 %v618, %v621
    %vm623 = vweird.f32 %v398
    %vm624 = vweird.f32 %v618
    %vm625 = vmor %vm623, %vm624
    %v626 = vsel %vm625, %v618, %v622
    %v627 = vand.u32 2147483647, %v398
    %vm628 = vcmp.eq.f32.partialorder %v627, 8.507059e+37
    %v629 = vand.u32 %v398, 2147483648
    %v630 = vor.u32 1.1754944e-38, %v629
    %v631 = vsel %vm628, %v630, %v626
    %v632 = vmul.f32 1.0, %v631
    %v633 = vrcp.pop %v399
    %v634 = vmul.f32 %v399, %v633
    %v635 = vsub.f32 1.0, %v634
    %v636 = vmul.f32 %v633, %v635
    %v637 = vadd.f32 %v633, %v636
    %vm638 = vweird.f32 %v399
    %vm639 = vweird.f32 %v633
    %vm640 = vmor %vm638, %vm639
    %v641 = vsel %vm640, %v633, %v637
    %v642 = vand.u32 2147483647, %v399
    %vm643 = vcmp.eq.f32.partialorder %v642, 8.507059e+37
    %v644 = vand.u32 %v399, 2147483648
    %v645 = vor.u32 1.1754944e-38, %v644
    %v646 = vsel %vm643, %v645, %v641
    %v647 = vmul.f32 1.0, %v646
    %v648 = vrcp.pop %v400
    %v649 = vmul.f32 %v400, %v648
    %v650 = vsub.f32 1.0, %v649
    %v651 = vmul.f32 %v648, %v650
    %v652 = vadd.f32 %v648, %v651
    %vm653 = vweird.f32 %v400
    %vm654 = vweird.f32 %v648
    %vm655 = vmor %vm653, %vm654
    %v656 = vsel %vm655, %v648, %v652
    %v657 = vand.u32 2147483647, %v400
    %vm658 = vcmp.eq.f32.partialorder %v657, 8.507059e+37
    %v659 = vand.u32 %v400, 2147483648
    %v660 = vor.u32 1.1754944e-38, %v659
    %v661 = vsel %vm658, %v660, %v656
    %v662 = vmul.f32 1.0, %v661
    %v663 = vrcp.pop %v401
    %v664 = vmul.f32 %v401, %v663
    %v665 = vsub.f32 1.0, %v664
    %v666 = vmul.f32 %v663, %v665
    %v667 = vadd.f32 %v663, %v666
    %vm668 = vweird.f32 %v401
    %vm669 = vweird.f32 %v663
    %vm670 = vmor %vm668, %vm669
    %v671 = vsel %vm670, %v663, %v667
    %v672 = vand.u32 2147483647, %v401
    %vm673 = vcmp.eq.f32.partialorder %v672, 8.507059e+37
    %v674 = vand.u32 %v401, 2147483648
    %v675 = vor.u32 1.1754944e-38, %v674
    %v676 = vsel %vm673, %v675, %v671
    %v677 = vmul.f32 1.0, %v676
    %v678 = vrcp.pop %v402
    %v679 = vmul.f32 %v402, %v678
    %v680 = vsub.f32 1.0, %v679
    %v681 = vmul.f32 %v678, %v680
    %v682 = vadd.f32 %v678, %v681
    %vm683 = vweird.f32 %v402
    %vm684 = vweird.f32 %v678
    %vm685 = vmor %vm683, %vm684
    %v686 = vsel %vm685, %v678, %v682
    %v687 = vand.u32 2147483647, %v402
    %vm688 = vcmp.eq.f32.partialorder %v687, 8.507059e+37
    %v689 = vand.u32 %v402, 2147483648
    %v690 = vor.u32 1.1754944e-38, %v689
    %v691 = vsel %vm688, %v690, %v686
    %v692 = vmul.f32 1.0, %v691
    %v693 = vrcp.pop %v403
    %v694 = vmul.f32 %v403, %v693
    %v695 = vsub.f32 1.0, %v694
    %v696 = vmul.f32 %v693, %v695
    %v697 = vadd.f32 %v693, %v696
    %vm698 = vweird.f32 %v403
    %vm699 = vweird.f32 %v693
    %vm700 = vmor %vm698, %vm699
    %v701 = vsel %vm700, %v693, %v697
    %v702 = vand.u32 2147483647, %v403
    %vm703 = vcmp.eq.f32.partialorder %v702, 8.507059e+37
    %v704 = vand.u32 %v403, 2147483648
    %v705 = vor.u32 1.1754944e-38, %v704
    %v706 = vsel %vm703, %v705, %v701
    %v707 = vmul.f32 1.0, %v706
    %v708 = vrcp.pop %v404
    %v709 = vmul.f32 %v404, %v708
    %v710 = vsub.f32 1.0, %v709
    %v711 = vmul.f32 %v708, %v710
    %v712 = vadd.f32 %v708, %v711
    %vm713 = vweird.f32 %v404
    %vm714 = vweird.f32 %v708
    %vm715 = vmor %vm713, %vm714
    %v716 = vsel %vm715, %v708, %v712
    %v717 = vand.u32 2147483647, %v404
    %vm718 = vcmp.eq.f32.partialorder %v717, 8.507059e+37
    %v719 = vand.u32 %v404, 2147483648
    %v720 = vor.u32 1.1754944e-38, %v719
    %v721 = vsel %vm718, %v720, %v716
    %v722 = vmul.f32 1.0, %v721
    %v723 = vrcp.pop %v405
    %v724 = vmul.f32 %v405, %v723
    %v725 = vsub.f32 1.0, %v724
    %v726 = vmul.f32 %v723, %v725
    %v727 = vadd.f32 %v723, %v726
    %vm728 = vweird.f32 %v405
    %vm729 = vweird.f32 %v723
    %vm730 = vmor %vm728, %vm729
    %v731 = vsel %vm730, %v723, %v727
    %v732 = vand.u32 2147483647, %v405
    %vm733 = vcmp.eq.f32.partialorder %v732, 8.507059e+37
    %v734 = vand.u32 %v405, 2147483648
    %v735 = vor.u32 1.1754944e-38, %v734
    %v736 = vsel %vm733, %v735, %v731
    %v737 = vmul.f32 1.0, %v736
    %v738 = vrcp.pop %v406
    %v739 = vmul.f32 %v406, %v738
    %v740 = vsub.f32 1.0, %v739
    %v741 = vmul.f32 %v738, %v740
    %v742 = vadd.f32 %v738, %v741
    %vm743 = vweird.f32 %v406
    %vm744 = vweird.f32 %v738
    %vm745 = vmor %vm743, %vm744
    %v746 = vsel %vm745, %v738, %v742
    %v747 = vand.u32 2147483647, %v406
    %vm748 = vcmp.eq.f32.partialorder %v747, 8.507059e+37
    %v749 = vand.u32 %v406, 2147483648
    %v750 = vor.u32 1.1754944e-38, %v749
    %v751 = vsel %vm748, %v750, %v746
    %v752 = vmul.f32 1.0, %v751
    %v753 = vrcp.pop %v407
    %v754 = vmul.f32 %v407, %v753
    %v755 = vsub.f32 1.0, %v754
    %v756 = vmul.f32 %v753, %v755
    %v757 = vadd.f32 %v753, %v756
    %vm758 = vweird.f32 %v407
    %vm759 = vweird.f32 %v753
    %vm760 = vmor %vm758, %vm759
    %v761 = vsel %vm760, %v753, %v757
    %v762 = vand.u32 2147483647, %v407
    %vm763 = vcmp.eq.f32.partialorder %v762, 8.507059e+37
    %v764 = vand.u32 %v407, 2147483648
    %v765 = vor.u32 1.1754944e-38, %v764
    %v766 = vsel %vm763, %v765, %v761
    %v767 = vmul.f32 1.0, %v766
    %v768 = vadd.f32 %v422, %v437
    %v769 = vadd.f32 %v768, %v452
    %v770 = vadd.f32 %v769, %v467
    %v771 = vadd.f32 %v770, %v482
    %v772 = vadd.f32 %v771, %v497
    %v773 = vadd.f32 %v772, %v512
    %v774 = vadd.f32 %v773, %v527
    %775 = vadd.xlane.f32.xlu0 %v774
    %v776 = vpop.xlane.xlu0 %775
    %v777 = vadd.f32 %v542, %v557
    %v778 = vadd.f32 %v777, %v572
    %v779 = vadd.f32 %v778, %v587
    %v780 = vadd.f32 %v779, %v602
    %v781 = vadd.f32 %v780, %v617
    %v782 = vadd.f32 %v781, %v632
    %v783 = vadd.f32 %v782, %v647
    %784 = vadd.xlane.f32.xlu0 %v783
    %v785 = vpop.xlane.xlu0 %784
    %v786 = vadd.f32 %v662, %v677
    %v787 = vadd.f32 %v786, %v692
    %v788 = vadd.f32 %v787, %v707
    %v789 = vadd.f32 %v788, %v722
    %v790 = vadd.f32 %v789, %v737
    %v791 = vadd.f32 %v790, %v752
    %v792 = vadd.f32 %v791, %v767
    %793 = vadd.xlane.f32.xlu0 %v792
    %v794 = vpop.xlane.xlu0 %793
    %v795 = vrcp.pop 1024.0
    %v796 = vmul.f32 1024.0, %v795
    %v797 = vsub.f32 1.0, %v796
    %v798 = vmul.f32 %v795, %v797
    %v799 = vadd.f32 %v795, %v798
    %vm800 = vweird.f32 %v795
    %v801 = vsel %vm800, %v795, %v799
    %v802 = vmul.f32 %v776, %v801
    %v803 = vmul.f32 %v785, %v801
    %v804 = vmul.f32 %v794, %v801
    %v805 = vsub.f32 %v422, %v802
    %v806 = vsub.f32 %v437, %v802
    %v807 = vsub.f32 %v452, %v802
    %v808 = vsub.f32 %v467, %v802
    %v809 = vsub.f32 %v482, %v802
    %v810 = vsub.f32 %v497, %v802
    %v811 = vsub.f32 %v512, %v802
    %v812 = vsub.f32 %v527, %v802
    %v813 = vsub.f32 %v542, %v803
    %v814 = vsub.f32 %v557, %v803
    %v815 = vsub.f32 %v572, %v803
    %v816 = vsub.f32 %v587, %v803
    %v817 = vsub.f32 %v602, %v803
    %v818 = vsub.f32 %v617, %v803
    %v819 = vsub.f32 %v632, %v803
    %v820 = vsub.f32 %v647, %v803
    %v821 = vsub.f32 %v662, %v804
    %v822 = vsub.f32 %v677, %v804
    %v823 = vsub.f32 %v692, %v804
    %v824 = vsub.f32 %v707, %v804
    %v825 = vsub.f32 %v722, %v804
    %v826 = vsub.f32 %v737, %v804
    %v827 = vsub.f32 %v752, %v804
    %v828 = vsub.f32 %v767, %v804
    %v829 = vmul.f32 %v805, %v805
    %v830 = vmul.f32 %v806, %v806
    %v831 = vmul.f32 %v807, %v807
    %v832 = vmul.f32 %v808, %v808
    %v833 = vmul.f32 %v809, %v809
    %v834 = vmul.f32 %v810, %v810
    %v835 = vmul.f32 %v811, %v811
    %v836 = vmul.f32 %v812, %v812
    %v837 = vmul.f32 %v813, %v813
    %v838 = vmul.f32 %v814, %v814
    %v839 = vmul.f32 %v815, %v815
    %v840 = vmul.f32 %v816, %v816
    %v841 = vmul.f32 %v817, %v817
    %v842 = vmul.f32 %v818, %v818
    %v843 = vmul.f32 %v819, %v819
    %v844 = vmul.f32 %v820, %v820
    %v845 = vmul.f32 %v821, %v821
    %v846 = vmul.f32 %v822, %v822
    %v847 = vmul.f32 %v823, %v823
    %v848 = vmul.f32 %v824, %v824
    %v849 = vmul.f32 %v825, %v825
    %v850 = vmul.f32 %v826, %v826
    %v851 = vmul.f32 %v827, %v827
    %v852 = vmul.f32 %v828, %v828
    %v853 = vadd.f32 %v829, %v830
    %v854 = vadd.f32 %v853, %v831
    %v855 = vadd.f32 %v854, %v832
    %v856 = vadd.f32 %v855, %v833
    %v857 = vadd.f32 %v856, %v834
    %v858 = vadd.f32 %v857, %v835
    %v859 = vadd.f32 %v858, %v836
    %860 = vadd.xlane.f32.xlu0 %v859
    %v861 = vpop.xlane.xlu0 %860
    %v862 = vadd.f32 %v837, %v838
    %v863 = vadd.f32 %v862, %v839
    %v864 = vadd.f32 %v863, %v840
    %v865 = vadd.f32 %v864, %v841
    %v866 = vadd.f32 %v865, %v842
    %v867 = vadd.f32 %v866, %v843
    %v868 = vadd.f32 %v867, %v844
    %869 = vadd.xlane.f32.xlu0 %v868
    %v870 = vpop.xlane.xlu0 %869
    %v871 = vadd.f32 %v845, %v846
    %v872 = vadd.f32 %v871, %v847
    %v873 = vadd.f32 %v872, %v848
    %v874 = vadd.f32 %v873, %v849
    %v875 = vadd.f32 %v874, %v850
    %v876 = vadd.f32 %v875, %v851
    %v877 = vadd.f32 %v876, %v852
    %878 = vadd.xlane.f32.xlu0 %v877
    %v879 = vpop.xlane.xlu0 %878
    %v880 = vmul.f32 %v861, %v801
    %v881 = vmul.f32 %v870, %v801
    %v882 = vmul.f32 %v879, %v801
    %v883 = vld [vmem:[%s2] sm:$0xff]
    %v884 = vld [vmem:[%s2 + $0x8] sm:$0xff]
    %v885 = vld [vmem:[%s2 + $0x10] sm:$0xff]
    %v886 = vadd.f32 %v880, 1e-05
    %v887 = vadd.f32 %v881, 1e-05
    %v888 = vadd.f32 %v882, 1e-05
    %v889 = vrsqrt.pop %v886
    %v890 = vmul.f32 %v889, %v886
    %v891 = vmul.f32 %v890, %v889
    %v892 = vmul.f32 0.5, %v891
    %v893 = vsub.f32 1.5, %v892
    %v894 = vmul.f32 %v889, %v893
    %vm895 = vweird.f32 %v886
    %vm896 = vweird.f32 %v889
    %vm897 = vmor %vm895, %vm896
    %v898 = vsel %vm897, %v889, %v894
    %v899 = vrsqrt.pop %v887
    %v900 = vmul.f32 %v899, %v887
    %v901 = vmul.f32 %v900, %v899
    %v902 = vmul.f32 0.5, %v901
    %v903 = vsub.f32 1.5, %v902
    %v904 = vmul.f32 %v899, %v903
    %vm905 = vweird.f32 %v887
    %vm906 = vweird.f32 %v899
    %vm907 = vmor %vm905, %vm906
    %v908 = vsel %vm907, %v899, %v904
    %v909 = vrsqrt.pop %v888
    %v910 = vmul.f32 %v909, %v888
    %v911 = vmul.f32 %v910, %v909
    %v912 = vmul.f32 0.5, %v911
    %v913 = vsub.f32 1.5, %v912
    %v914 = vmul.f32 %v909, %v913
    %vm915 = vweird.f32 %v888
    %vm916 = vweird.f32 %v909
    %vm917 = vmor %vm915, %vm916
    %v918 = vsel %vm917, %v909, %v914
    %v919 = vmul.f32 %v883, %v898
    %v920 = vmul.f32 %v884, %v908
    %v921 = vmul.f32 %v885, %v918
    %923 = vset.pattern.permute.xlu0 0
    %924 = vperm.xlu0 %923, %v919
    %v925 = vpop.permute.xlu0 %924
    %928 = vset.pattern.permute.xlu0 0
    %929 = vperm.xlu0 %928, %v920
    %v930 = vpop.permute.xlu0 %929
    %933 = vset.pattern.permute.xlu0 0
    %934 = vperm.xlu0 %933, %v921
    %v935 = vpop.permute.xlu0 %934
    %v937 = vmul.f32 %v805, %v925
    %v938 = vmul.f32 %v806, %v925
    %v939 = vmul.f32 %v807, %v925
    %v940 = vmul.f32 %v808, %v925
    %v941 = vmul.f32 %v809, %v925
    %v942 = vmul.f32 %v810, %v925
    %v943 = vmul.f32 %v811, %v925
    %v944 = vmul.f32 %v812, %v925
    %v945 = vmul.f32 %v813, %v930
    %v946 = vmul.f32 %v814, %v930
    %v947 = vmul.f32 %v815, %v930
    %v948 = vmul.f32 %v816, %v930
    %v949 = vmul.f32 %v817, %v930
    %v950 = vmul.f32 %v818, %v930
    %v951 = vmul.f32 %v819, %v930
    %v952 = vmul.f32 %v820, %v930
    %v953 = vmul.f32 %v821, %v935
    %v954 = vmul.f32 %v822, %v935
    %v955 = vmul.f32 %v823, %v935
    %v956 = vmul.f32 %v824, %v935
    %v957 = vmul.f32 %v825, %v935
    %v958 = vmul.f32 %v826, %v935
    %v959 = vmul.f32 %v827, %v935
    %v960 = vmul.f32 %v828, %v935
    %v961 = vld [vmem:[%s3] sm:$0xff]
    %v962 = vld [vmem:[%s3 + $0x8] sm:$0xff]
    %v963 = vld [vmem:[%s3 + $0x10] sm:$0xff]
    %965 = vset.pattern.permute.xlu0 0
    %966 = vperm.xlu0 %965, %v961
    %v967 = vpop.permute.xlu0 %966
    %970 = vset.pattern.permute.xlu0 0
    %971 = vperm.xlu0 %970, %v962
    %v972 = vpop.permute.xlu0 %971
    %975 = vset.pattern.permute.xlu0 0
    %976 = vperm.xlu0 %975, %v963
    %v977 = vpop.permute.xlu0 %976
    %v979 = vadd.f32 %v937, %v967
    %v980 = vadd.f32 %v938, %v967
    %v981 = vadd.f32 %v939, %v967
    %v982 = vadd.f32 %v940, %v967
    %v983 = vadd.f32 %v941, %v967
    %v984 = vadd.f32 %v942, %v967
    %v985 = vadd.f32 %v943, %v967
    %v986 = vadd.f32 %v944, %v967
    %v987 = vadd.f32 %v945, %v972
    %v988 = vadd.f32 %v946, %v972
    %v989 = vadd.f32 %v947, %v972
    %v990 = vadd.f32 %v948, %v972
    %v991 = vadd.f32 %v949, %v972
    %v992 = vadd.f32 %v950, %v972
    %v993 = vadd.f32 %v951, %v972
    %v994 = vadd.f32 %v952, %v972
    %v995 = vadd.f32 %v953, %v977
    %v996 = vadd.f32 %v954, %v977
    %v997 = vadd.f32 %v955, %v977
    %v998 = vadd.f32 %v956, %v977
    %v999 = vadd.f32 %v957, %v977
    %v1000 = vadd.f32 %v958, %v977
    %v1001 = vadd.f32 %v959, %v977
    %v1002 = vadd.f32 %v960, %v977
    %1003 = vst [vmem:[#allocation5] sm:$0xff] %v979
    %1004 = vst [vmem:[#allocation5 + $0x8] sm:$0xff] %v980
    %1005 = vst [vmem:[#allocation5 + $0x10] sm:$0xff] %v981
    %1006 = vst [vmem:[#allocation5 + $0x18] sm:$0xff] %v982
    %1007 = vst [vmem:[#allocation5 + $0x20] sm:$0xff] %v983
    %1008 = vst [vmem:[#allocation5 + $0x28] sm:$0xff] %v984
    %1009 = vst [vmem:[#allocation5 + $0x30] sm:$0xff] %v985
    %1010 = vst [vmem:[#allocation5 + $0x38] sm:$0xff] %v986
    %1011 = vst [vmem:[#allocation5 + $0x40] sm:$0xff] %v987
    %1012 = vst [vmem:[#allocation5 + $0x48] sm:$0xff] %v988
    %1013 = vst [vmem:[#allocation5 + $0x50] sm:$0xff] %v989
    %1014 = vst [vmem:[#allocation5 + $0x58] sm:$0xff] %v990
    %1015 = vst [vmem:[#allocation5 + $0x60] sm:$0xff] %v991
    %1016 = vst [vmem:[#allocation5 + $0x68] sm:$0xff] %v992
    %1017 = vst [vmem:[#allocation5 + $0x70] sm:$0xff] %v993
    %1018 = vst [vmem:[#allocation5 + $0x78] sm:$0xff] %v994
    %1019 = vst [vmem:[#allocation5 + $0x80] sm:$0xff] %v995
    %1020 = vst [vmem:[#allocation5 + $0x88] sm:$0xff] %v996
    %1021 = vst [vmem:[#allocation5 + $0x90] sm:$0xff] %v997
    %1022 = vst [vmem:[#allocation5 + $0x98] sm:$0xff] %v998
    %1023 = vst [vmem:[#allocation5 + $0xa0] sm:$0xff] %v999
    %1024 = vst [vmem:[#allocation5 + $0xa8] sm:$0xff] %v1000
    %1025 = vst [vmem:[#allocation5 + $0xb0] sm:$0xff] %v1001
    %1026 = vst [vmem:[#allocation5 + $0xb8] sm:$0xff] %v1002
    // Predicated region
    $region22: #{tpu_custom_call.1} parent=1 // pred_check
      _
    $region23: #{tpu_custom_call.1} parent=1 // pred_check_branch
      %1028 = sbr.rel (0) target = $region25
    $region24: #{tpu_custom_call.1} parent=1 // pred_region
      %1030 = vsyncadd [#allocation4], 0
      %s1031 = sshll.u32 [#allocation5], 4
      %s1032 = int_to_ptr.vmem [resolvable:$true] %s1031
      %s1033 = sshll.u32 %s4, 4
      %s1034 = int_to_ptr.hbm [resolvable:$true] %s1033
      %1039 = dma.vmem_to_hbm [thread:$0]  %s1032, 3072, %s1034, [#allocation4], 1024, 1024, 64
    $region25: #{tpu_custom_call.1} parent=1 // pred_fallthru
      _
    // Predicated region
    $region26: #{tpu_custom_call.1} parent=1 // pred_check
      _
    $region27: #{tpu_custom_call.1} parent=1 // pred_check_branch
      %1041 = sbr.rel (0) target = $region29
    $region28: #{tpu_custom_call.1} parent=1 // pred_region
      %1043 = dma.done [#allocation4], 3072
    $region29: #{tpu_custom_call.1} parent=1 // pred_fallthru
      _
    %1044 = vsyncpa [#allocation3], 1
    %1045 = vsyncpa [#allocation4], 1

</llo_original>
